<compile_context>
chip_gen: v6e
topology: v6e:2x2x1
jax: 0.10.0
libtpu: 0.0.40
codegen_flags: <defaults>
</compile_context>

<pallas_src>
import functools

import jax
import jax.numpy as jnp
from jax.experimental import pallas as pl
from jax.experimental.pallas import tpu as pltpu

_X_BUFFER_BUDGET = 4 * 1024 * 1024  # bytes per x block (double-buffered by Pallas)


def _round_up(n, m):
    return ((n + m - 1) // m) * m


def _linreg_kernel(x_ref, w_ref, b_ref, y_ref, acc_ref, *, num_features, tile_f):
    """One (batch-tile, feature-tile) step of y = sum(x * w, -1) + b.

    x_ref: (TILE_B, TILE_F) VMEM    w_ref: (1, TILE_F) VMEM
    b_ref: (1, 1) SMEM              y_ref: (TILE_B, 1) VMEM
    acc_ref: (TILE_B, 1) f32 VMEM scratch, persistent across the K axis.
    """
    k = pl.program_id(1)

    @pl.when(k == 0)
    def _():
        acc_ref[...] = jnp.zeros_like(acc_ref)

    x = x_ref[...].astype(jnp.float32)
    w = w_ref[...].astype(jnp.float32)
    p = x * w  # VPU broadcast-multiply; MXU deliberately unused (N == 1).
    if num_features % tile_f != 0:
        # Ragged last K block: zero the out-of-bounds lanes before reducing
        # (OOB reads are unspecified, so mask the product, not just one side).
        col = k * tile_f + jax.lax.broadcasted_iota(jnp.int32, p.shape, 1)
        p = jnp.where(col < num_features, p, 0.0)
    acc_ref[...] += jnp.sum(p, axis=-1, keepdims=True)  # XLU lane reduction

    @pl.when(k == pl.num_programs(1) - 1)
    def _():
        y_ref[...] = (acc_ref[...] + b_ref[0, 0]).astype(y_ref.dtype)


def _pick_tiles(batch, num_features, itemsize):
    """Choose (tile_b, tile_f) from a per-buffer byte budget.

    tile_f == num_features (single K step) unless even an 8-row block of the
    full feature dim would exceed the budget; otherwise a 128-multiple chunk.
    tile_b fills the budget but keeps >= ~4 batch grid steps when batch allows
    (v7x megacore), and is a multiple of 8 sublanes.
    """
    min_rows = 8
    if min_rows * num_features * itemsize <= _X_BUFFER_BUDGET:
        tile_f = num_features
    else:
        tile_f = max(128, (_X_BUFFER_BUDGET // (min_rows * itemsize * 128)) * 128)
        tile_f = min(tile_f, (num_features // 128) * 128)

    rows_budget = max(min_rows, (_X_BUFFER_BUDGET // (itemsize * tile_f)) // 8 * 8)
    rows_target = _round_up(pl.cdiv(batch, 4), 8)  # aim for >= ~4 batch tiles
    tile_b = max(min_rows, min(rows_budget, rows_target))
    tile_b = min(tile_b, _round_up(batch, 8))
    return tile_b, tile_f


@functools.partial(jax.jit, static_argnames=("use_pallas",))
def linear_regression_forward(x, w, b, *, use_pallas=None):
    """Pallas equivalent of LinearRegression.forward.

    x: (batch, num_features)  f32 or bf16
    w: (1, num_features)      (torch.nn.Linear.weight layout)
    b: scalar                 (torch.nn.Linear.bias[0])
    returns (y, x) with y: (batch, 1) f32
    """
    batch, num_features = x.shape
    w = jnp.reshape(w, (1, num_features))
    b2d = jnp.reshape(jnp.asarray(b, jnp.float32), (1, 1))

    if use_pallas is None:
        # Per-call overhead dwarfs the math for tiny problems; let XLA fuse.
        use_pallas = batch * num_features >= (1 << 16)
    if not use_pallas:
        y = x.astype(jnp.float32) @ w.astype(jnp.float32).T + b2d[0, 0]
        return y, x

    itemsize = jnp.dtype(x.dtype).itemsize
    tile_b, tile_f = _pick_tiles(batch, num_features, itemsize)
    grid = (pl.cdiv(batch, tile_b), pl.cdiv(num_features, tile_f))

    cost = pl.CostEstimate(
        flops=2 * batch * num_features,
        transcendentals=0,
        bytes_accessed=(batch * num_features * itemsize
                        + batch * 4
                        + num_features * jnp.dtype(w.dtype).itemsize + 4),
    )

    kernel = functools.partial(
        _linreg_kernel, num_features=num_features, tile_f=tile_f)

    y = pl.pallas_call(
        kernel,
        out_shape=jax.ShapeDtypeStruct((batch, 1), jnp.float32),
        grid=grid,
        in_specs=[
            # x: streamed (tile_b, tile_f) blocks, double-buffered by Pallas.
            pl.BlockSpec((tile_b, tile_f), lambda i, k: (i, k)),
            # w: only the current feature chunk; revisited blocks stay cheap.
            pl.BlockSpec((1, tile_f), lambda i, k: (0, k)),
            # bias scalar in SMEM.
            pl.BlockSpec((1, 1), lambda i, k: (0, 0),
                         memory_space=pltpu.MemorySpace.SMEM),
        ],
        out_specs=pl.BlockSpec((tile_b, 1), lambda i, k: (i, 0)),
        scratch_shapes=[pltpu.VMEM((tile_b, 1), jnp.float32)],
        compiler_params=pltpu.CompilerParams(
            dimension_semantics=("parallel", "arbitrary"),
        ),
        cost_estimate=cost,
    )(x, w, b2d)

    return y, x


if __name__ == "__main__":
    num_features = 32
    batch = 8

    key = jax.random.PRNGKey(0)
    kx, kw, kb = jax.random.split(key, 3)

    # Deterministic parameter init, mimicking nn.Linear's U(-1/sqrt(F), 1/sqrt(F)).
    bound = 1.0 / (num_features ** 0.5)
    w = jax.random.uniform(kw, (1, num_features), jnp.float32, -bound, bound)
    b = jax.random.uniform(kb, (), jnp.float32, -bound, bound)
    x = jax.random.normal(kx, (batch, num_features), jnp.float32)

    # Force the Pallas path even at demo size (the auto heuristic would hand a
    # problem this small to plain XLA fusion).
    y, x_out = linear_regression_forward(x, w, b, use_pallas=True)
    jax.block_until_ready((y, x_out))

    # Reference check against plain JAX.
    y_ref = x @ w.T + b
    assert y.shape == (batch, 1)
    assert x_out.shape == (batch, num_features)
    assert jnp.allclose(y, y_ref, atol=1e-5), "mismatch vs reference"
    assert jnp.array_equal(x_out, x), "passthrough x mismatch"

    print("KERNEL_OK")
</pallas_src>

<mosaic_0001>
module attributes {stable_mosaic.version = 11 : i64} {
  func.func @_linreg_kernel(%arg0: i32, %arg1: i32, %arg2: memref<8x32xf32, #tpu.memory_space<vmem>>, %arg3: memref<1x32xf32, #tpu.memory_space<vmem>>, %arg4: memref<1x1xf32, #tpu.memory_space<smem>>, %arg5: memref<8x1xf32, #tpu.memory_space<vmem>>, %arg6: memref<8x1xf32, #tpu.memory_space<vmem>>) attributes {dimension_semantics = [#tpu.dimension_semantics<parallel>, #tpu.dimension_semantics<arbitrary>], iteration_bounds = array<i64: 1, 1>, scalar_prefetch = 0 : i64, scratch_operands = 1 : i64, tpu.core_type = #tpu.core_type<tc>, window_params = [{transform_indices = @transform_0, window_bounds = array<i64: 8, 32>}, {transform_indices = @transform_1, window_bounds = array<i64: 1, 32>}, {transform_indices = @transform_2, window_bounds = array<i64: 1, 1>}, {transform_indices = @transform_3, window_bounds = array<i64: 8, 1>}]} {
    %c0_i32 = arith.constant 0 : i32
    %0 = arith.cmpi eq, %arg1, %c0_i32 : i32
    %1 = arith.extui %0 : i1 to i32
    %c0_i32_0 = arith.constant 0 : i32
    %2 = arith.cmpi ne, %1, %c0_i32_0 : i32
    scf.if %2 {
      %cst_10 = arith.constant 0.000000e+00 : f32
      %15 = vector.broadcast %cst_10 : f32 to vector<8x1xf32>
      %c0_11 = arith.constant 0 : index
      %c0_12 = arith.constant 0 : index
      %16 = vector.load %arg6[%c0_11, %c0_12] : memref<8x1xf32, #tpu.memory_space<vmem>>, vector<8x1xf32>
      tpu.vector_store %arg6[%c0_11, %c0_12], %15 {strides = array<i32>} : memref<8x1xf32, #tpu.memory_space<vmem>>, vector<8x1xf32>,
    } else {
    }
    %c0 = arith.constant 0 : index
    %c0_1 = arith.constant 0 : index
    %3 = vector.load %arg2[%c0, %c0_1] : memref<8x32xf32, #tpu.memory_space<vmem>>, vector<8x32xf32>
    %c0_2 = arith.constant 0 : index
    %c0_3 = arith.constant 0 : index
    %4 = vector.load %arg3[%c0_2, %c0_3] : memref<1x32xf32, #tpu.memory_space<vmem>>, vector<1x32xf32>
    %5 = vector.broadcast %4 : vector<1x32xf32> to vector<8x32xf32>
    %6 = arith.mulf %3, %5 : vector<8x32xf32>
    %c0_4 = arith.constant 0 : index
    %c0_5 = arith.constant 0 : index
    %7 = vector.load %arg6[%c0_4, %c0_5] : memref<8x1xf32, #tpu.memory_space<vmem>>, vector<8x1xf32>
    %cst = arith.constant dense<0.000000e+00> : vector<8xf32>
    %8 = vector.multi_reduction <add>, %6, %cst [1] : vector<8x32xf32> to vector<8xf32>
    %9 = vector.shape_cast %8 : vector<8xf32> to vector<8x1xf32>
    %10 = arith.addf %7, %9 : vector<8x1xf32>
    %c0_6 = arith.constant 0 : index
    %c0_7 = arith.constant 0 : index
    %11 = vector.load %arg6[%c0_6, %c0_7] : memref<8x1xf32, #tpu.memory_space<vmem>>, vector<8x1xf32>
    tpu.vector_store %arg6[%c0_6, %c0_7], %10 {strides = array<i32>} : memref<8x1xf32, #tpu.memory_space<vmem>>, vector<8x1xf32>,
    %c0_i32_8 = arith.constant 0 : i32
    %12 = arith.cmpi eq, %arg1, %c0_i32_8 : i32
    %13 = arith.extui %12 : i1 to i32
    %c0_i32_9 = arith.constant 0 : i32
    %14 = arith.cmpi ne, %13, %c0_i32_9 : i32
    scf.if %14 {
      %c0_10 = arith.constant 0 : index
      %c0_11 = arith.constant 0 : index
      %15 = vector.load %arg6[%c0_10, %c0_11] : memref<8x1xf32, #tpu.memory_space<vmem>>, vector<8x1xf32>
      %c0_12 = arith.constant 0 : index
      %c0_13 = arith.constant 0 : index
      %16 = memref.load %arg4[%c0_12, %c0_13] : memref<1x1xf32, #tpu.memory_space<smem>>
      %17 = vector.broadcast %16 : f32 to vector<8x1xf32>
      %18 = arith.addf %15, %17 : vector<8x1xf32>
      %c0_14 = arith.constant 0 : index
      %c0_15 = arith.constant 0 : index
      %19 = vector.load %arg5[%c0_14, %c0_15] : memref<8x1xf32, #tpu.memory_space<vmem>>, vector<8x1xf32>
      tpu.vector_store %arg5[%c0_14, %c0_15], %18 {strides = array<i32>} : memref<8x1xf32, #tpu.memory_space<vmem>>, vector<8x1xf32>,
    } else {
    }
    return
  }
  func.func @transform_0(%arg0: i32, %arg1: i32) -> (i32, i32) {
    %c0_i32 = arith.constant 0 : i32
    return %arg0, %arg1 : i32, i32
  }
  func.func @transform_1(%arg0: i32, %arg1: i32) -> (i32, i32) {
    %c0_i32 = arith.constant 0 : i32
    %c0_i32_0 = arith.constant 0 : i32
    return %c0_i32, %arg1 : i32, i32
  }
  func.func @transform_2(%arg0: i32, %arg1: i32) -> (i32, i32) {
    %c0_i32 = arith.constant 0 : i32
    %c0_i32_0 = arith.constant 0 : i32
    %c0_i32_1 = arith.constant 0 : i32
    return %c0_i32, %c0_i32_0 : i32, i32
  }
  func.func @transform_3(%arg0: i32, %arg1: i32) -> (i32, i32) {
    %c0_i32 = arith.constant 0 : i32
    %c0_i32_0 = arith.constant 0 : i32
    return %arg0, %c0_i32 : i32, i32
  }
}

</mosaic_0001>

<llo_original>
// kernel: linear_regression_forward.1
$region0: #{linear_regression_forward.1}
  #allocation0 [shape = 'u32[]', space=smem, size = 0x4, offset = 0x4, fixed_abs, tag = 'smem constant byte address 0x4 - core index']
  #allocation1 [shape = 'u32[144,128]{1,0:T(1,128)}', space=vmem, size = 0x12000, scoped, tag = 'internal scratch']
  #allocation2 [shape = 'f32[8,1]{1,0:T(8,128)}', space=vmem, size = 0x1000, scoped, tag = 'scratch operand']
  #allocation3 [shape = 'f32[1,1]{1,0:T(1,128)S(6)}', space=smem, size = 0x200, scoped, tag = 'scoped memory for linear_regression_forward.1']
  %s0 = inlined_call_operand.hbm [shape: f32[8,32], index: 0, kind: input, shape index: {}]
  %s1 = inlined_call_operand.vmem [shape: f32[1,32], index: 1, kind: input, shape index: {}]
  %s2 = inlined_call_operand.<no memory space> [shape: f32[1,1], index: 2, kind: input, shape index: {}]
  %s3 = inlined_call_operand.vmem [shape: f32[8,1], index: 3, kind: output, shape index: {}]
  %s4 = sld [smem:[#allocation0]]
  $region34: #{linear_regression_forward.1} parent=0
    _
  %s6 = ssub.s32 1, %s4
  %s7 = scalar_select 0, %s6, %s4
  %8 = sst [smem:[#allocation3]] %s2
  $region1: #{linear_regression_forward.1} parent=0
    #allocation4 [shape = 'u8[4096]{0}', space=vmem, size = 0x1000, scoped, tag = 'input window, operand 0, single buffered']
    #allocation5 [shape = 's32[1]{0}', space=sflag, size = 0x4, scoped, tag = 'scoped memory for linear_regression_forward.1']
    %9 = vsyncpa [#allocation5], 0
    // Predicated region
    $region2: #{linear_regression_forward.1} parent=1 // pred_check
      _
    $region3: #{linear_regression_forward.1} parent=1 // pred_check_branch
      %11 = sbr.rel (0) target = $region5
    $region4: #{linear_regression_forward.1} parent=1 // pred_region
      %s13 = ssub.s32 128, 128
      %14 = vsyncadd [#allocation5], %s13
      %s16 = sshll.u32 [#allocation4], 4
      %s17 = int_to_ptr.vmem [resolvable:$true] %s16
      %19 = dma.hbm_to_vmem [thread:$0]  %s0, 128, %s17, [#allocation5]
    $region5: #{linear_regression_forward.1} parent=1 // pred_fallthru
      _
    // Predicated region
    $region6: #{linear_regression_forward.1} parent=1 // pred_check
      _
    $region7: #{linear_regression_forward.1} parent=1 // pred_check_branch
      %21 = sbr.rel (0) target = $region9
    $region8: #{linear_regression_forward.1} parent=1 // pred_region
      _
    $region9: #{linear_regression_forward.1} parent=1 // pred_fallthru
      _
    // Predicated region
    $region10: #{linear_regression_forward.1} parent=1 // pred_check
      _
    $region11: #{linear_regression_forward.1} parent=1 // pred_check_branch
      %23 = sbr.rel (0) target = $region13
    $region12: #{linear_regression_forward.1} parent=1 // pred_region
      _
    $region13: #{linear_regression_forward.1} parent=1 // pred_fallthru
      _
    // Predicated region
    $region14: #{linear_regression_forward.1} parent=1 // pred_check
      _
    $region15: #{linear_regression_forward.1} parent=1 // pred_check_branch
      %25 = sbr.rel (0) target = $region17
    $region16: #{linear_regression_forward.1} parent=1 // pred_region
      %26 = dma.done [#allocation5], 128
    $region17: #{linear_regression_forward.1} parent=1 // pred_fallthru
      _
    %p27 = scmp.eq.s32.totalorder 0, 0
    // Predicated region
    $region18: #{linear_regression_forward.1} parent=1 // pred_check
      %p28 = pneg %p27
    $region19: #{linear_regression_forward.1} parent=1 // pred_check_branch
      %30 = sbr.rel (%p28) target = $region21
    $region20: #{linear_regression_forward.1} parent=1 // pred_region
      %vm31 = vcmask 7168
      %32 = vst.msk [vmem:[#allocation2] sm:$0xff] %vm31, 0.0
    $region21: #{linear_regression_forward.1} parent=1 // pred_fallthru
      _
    %v33 = vld [vmem:[#allocation4] sm:$0xff]
    %v34 = vld [vmem:[%s1] sm:$0x1]
    %v36 = vlaneseq
    %v37 = vshrl.u32 %v36, 7
    %v38 = vsub.s32 0, %v37
    %v39 = vrot.slane %v34, %v38
    %v41 = vmul.f32 %v33, %v39
    %v42 = vld [vmem:[#allocation2] sm:$0xff]
    %vm43 = vcmask 261120
    %v44 = vsel %vm43, %v41, 0.0
    %45 = vadd.xlane.f32.xlu0 %v44
    %v46 = vpop.xlane.xlu0 %45
    %v47 = vadd.f32 %v42, %v46
    %vm48 = vcmask 7168
    %49 = vst.msk [vmem:[#allocation2] sm:$0xff] %vm48, %v47
    // Predicated region
    $region22: #{linear_regression_forward.1} parent=1 // pred_check
      %p50 = pneg %p27
    $region23: #{linear_regression_forward.1} parent=1 // pred_check_branch
      %52 = sbr.rel (%p50) target = $region25
    $region24: #{linear_regression_forward.1} parent=1 // pred_region
      %v53 = vld [vmem:[#allocation2] sm:$0xff]
      %s54 = sld [smem:[#allocation3]]
      %v55 = vstv %s54
      %v56 = vadd.f32 %v53, %v55
      %57 = vst.msk [vmem:[%s3] sm:$0xff] %vm48, %v56
    $region25: #{linear_regression_forward.1} parent=1 // pred_fallthru
      _
    // Predicated region
    $region26: #{linear_regression_forward.1} parent=1 // pred_check
      _
    $region27: #{linear_regression_forward.1} parent=1 // pred_check_branch
      %59 = sbr.rel (0) target = $region29
    $region28: #{linear_regression_forward.1} parent=1 // pred_region
      _
    $region29: #{linear_regression_forward.1} parent=1 // pred_fallthru
      _
    // Predicated region
    $region30: #{linear_regression_forward.1} parent=1 // pred_check
      _
    $region31: #{linear_regression_forward.1} parent=1 // pred_check_branch
      %61 = sbr.rel (0) target = $region33
    $region32: #{linear_regression_forward.1} parent=1 // pred_region
      _
    $region33: #{linear_regression_forward.1} parent=1 // pred_fallthru
      _
    %62 = vsyncpa [#allocation5], 1

</llo_original>
